<compile_context>
chip_gen: v5e
topology: v5e:2x2
jax: 0.10.0
libtpu: 0.0.40
codegen_flags: <defaults>
</compile_context>

<pallas_src>
import jax
import jax.numpy as jnp
from jax.experimental import pallas as pl
from jax.experimental.pallas import tpu as pltpu
import numpy as np


def _make_moment_kernel(tn, w, r_valid, steps_per_chunk, first_masked, need_mask):
    """Builds the streaming moment-accumulation kernel.

    tn              : rows per tile (multiple of 8)
    w               : densified width (lane axis)
    r_valid         : number of physically valid densified rows
    steps_per_chunk : inner (arbitrary) grid extent per parallel chunk
    first_masked    : first tile index whose rows can reach past r_valid
    need_mask       : static bool -- emit mask code at all?
    """
    sub = tn // 8

    def kernel(pred_ref, gt_ref, out_ref, sx, sy, sxx, syy, sxy):
        p_id = pl.program_id(0)
        i = pl.program_id(1)

        @pl.when(i == 0)
        def _init():
            sx[...] = jnp.zeros_like(sx)
            sy[...] = jnp.zeros_like(sy)
            sxx[...] = jnp.zeros_like(sxx)
            syy[...] = jnp.zeros_like(syy)
            sxy[...] = jnp.zeros_like(sxy)

        x = pred_ref[...]
        y = gt_ref[...]
        if x.dtype != jnp.float32:
            x = x.astype(jnp.float32)
        if y.dtype != jnp.float32:
            y = y.astype(jnp.float32)

        def accumulate(xv, yv):
            # (tn, w) -> (tn//8, 8, w): layout-preserving split of the sublane
            # axis; the axis-0 sum is aligned (8, w)-tile VPU adds only.
            xr = xv.reshape(sub, 8, w)
            yr = yv.reshape(sub, 8, w)
            sx[...] += jnp.sum(xr, axis=0)
            sy[...] += jnp.sum(yr, axis=0)
            sxx[...] += jnp.sum(xr * xr, axis=0)
            syy[...] += jnp.sum(yr * yr, axis=0)
            sxy[...] += jnp.sum(xr * yr, axis=0)

        if need_mask:
            tile_idx = p_id * steps_per_chunk + i

            @pl.when(tile_idx < first_masked)
            def _full_tile():
                accumulate(x, y)

            @pl.when(tile_idx >= first_masked)
            def _ragged_tile():
                # Mask BEFORE the products so OOB garbage never enters x*x etc.
                rows = (jax.lax.broadcasted_iota(jnp.int32, (tn, 1), 0)
                        + tile_idx * tn)
                valid = rows < r_valid
                accumulate(jnp.where(valid, x, 0.0), jnp.where(valid, y, 0.0))
        else:
            accumulate(x, y)

        @pl.when(i == pl.num_programs(1) - 1)
        def _writeout():
            out_ref[0, 0, :, :] = sx[...]
            out_ref[0, 1, :, :] = sy[...]
            out_ref[0, 2, :, :] = sxx[...]
            out_ref[0, 3, :, :] = syy[...]
            out_ref[0, 4, :, :] = sxy[...]

    return kernel


def _choose_row_tile(r, w, itemsize=4, max_block_bytes=4 << 20):
    """Row tile: multiple of 8, <= r, per-input block <= ~4 MiB using the
    lane-padded width (blocks are padded to 128 lanes in VMEM)."""
    w_pad = -(-w // 128) * 128
    rows_by_bytes = max(8, max_block_bytes // max(w_pad * itemsize, 1))
    tn = min(rows_by_bytes, (r // 8) * 8)
    return max(8, (tn // 8) * 8)


def ccc_loss(prediction, ground_truth, *, tn=None, num_parallel=2):
    """prediction, ground_truth: [N, D]. Returns [D] float32 (1 - ccc)."""
    assert prediction.shape == ground_truth.shape and prediction.ndim == 2
    n, d = prediction.shape
    itemsize = jnp.dtype(prediction.dtype).itemsize

    # ---- lane densification (small D would waste (128-D)/128 of every vreg).
    g = max(1, min(128 // d, n // 8)) if d < 128 else 1
    w = g * d

    # Zero-pad rows so the [N, D] -> [N/g, g*D] reshape is valid and there are
    # at least 8 densified rows.  Zero rows add nothing to the moments.
    n_pad = -(-n // g) * g
    if n_pad < 8 * g:
        n_pad = 8 * g
    if n_pad != n:
        pad = ((0, n_pad - n), (0, 0))
        prediction = jnp.pad(prediction, pad)
        ground_truth = jnp.pad(ground_truth, pad)
    r = n_pad // g
    pred2 = prediction.reshape(r, w)      # free row-major re-interpretation
    gt2 = ground_truth.reshape(r, w)

    # ---- tiling / grid.
    if tn is None:
        tn = _choose_row_tile(r, w, itemsize=itemsize)
    tn = max(8, min((tn // 8) * 8, (r // 8) * 8))

    s_tiles = pl.cdiv(r, tn)
    p_split = num_parallel if s_tiles >= num_parallel else 1
    spc = pl.cdiv(s_tiles, p_split)              # inner steps per chunk
    total_tiles = p_split * spc
    first_masked = r // tn                       # tiles [0, first_masked) full
    need_mask = total_tiles > first_masked       # static

    kernel = _make_moment_kernel(tn, w, r, spc, first_masked, need_mask)

    def in_map(p, i):
        # Clamp so duplicated trailing tiles of the last chunk stay in bounds;
        # their rows are zeroed by the mask in the kernel.
        return (jnp.minimum(p * spc + i, s_tiles - 1), 0)

    moments = pl.pallas_call(
        kernel,
        out_shape=jax.ShapeDtypeStruct((p_split, 5, 8, w), jnp.float32),
        grid_spec=pltpu.PrefetchScalarGridSpec(
            num_scalar_prefetch=0,
            grid=(p_split, spc),
            in_specs=[
                pl.BlockSpec((tn, w), in_map),
                pl.BlockSpec((tn, w), in_map),
            ],
            out_specs=pl.BlockSpec((1, 5, 8, w), lambda p, i: (p, 0, 0, 0)),
            scratch_shapes=[pltpu.VMEM((8, w), jnp.float32)] * 5,
        ),
        compiler_params=pltpu.CompilerParams(
            dimension_semantics=("parallel", "arbitrary"),
            vmem_limit_bytes=48 * 1024 * 1024,
        ),
        cost_estimate=pl.CostEstimate(
            flops=int(10 * r * w),
            transcendentals=0,
            bytes_accessed=int(2 * r * w * itemsize + p_split * 5 * 8 * w * 4),
        ),
    )(pred2, gt2)

    # ---- tiny epilogue (D elements): combine partials, fold lanes, finalize.
    m = moments.sum(axis=(0, 2))            # (5, W): cores + sublane partials
    m = m.reshape(5, g, d).sum(axis=1)      # (5, D): fold lane densification
    sx, sy, sxx, syy, sxy = m[0], m[1], m[2], m[3], m[4]

    nf = jnp.float32(n)
    nt = jnp.float32(n * d)
    mean_p = sx / nf
    mean_g = sy / nf
    # Centered sums of squares / cross products (clamped: f32 raw-moment
    # cancellation could otherwise go slightly negative -> sqrt(NaN)).
    ssp = jnp.maximum(sxx - nf * mean_p * mean_p, 0.0)
    ssg = jnp.maximum(syy - nf * mean_g * mean_g, 0.0)
    spg = sxy - nf * mean_p * mean_g
    var_p = ssp / (nf - 1.0)                # torch.var(x, 0), unbiased
    var_g = ssg / (nf - 1.0)
    cor = jnp.sum(spg) / (jnp.sqrt(jnp.sum(ssp)) * jnp.sqrt(jnp.sum(ssg)))
    gss_p = jnp.maximum(jnp.sum(sxx) - jnp.sum(sx) ** 2 / nt, 0.0)
    gss_g = jnp.maximum(jnp.sum(syy) - jnp.sum(sy) ** 2 / nt, 0.0)
    sd_p = jnp.sqrt(gss_p / (nt - 1.0))     # torch.std(x), global unbiased
    sd_g = jnp.sqrt(gss_g / (nt - 1.0))
    numerator = 2.0 * cor * sd_g * sd_p
    denominator = var_g + var_p + (mean_g - mean_p) ** 2
    return 1.0 - numerator / denominator    # (D,)


def _ccc_loss_ref(prediction, ground_truth):
    # numpy reference mirroring the PyTorch module exactly
    p = np.asarray(prediction, dtype=np.float64)
    g = np.asarray(ground_truth, dtype=np.float64)
    mean_gt = g.mean(axis=0)
    mean_pred = p.mean(axis=0)
    var_gt = g.var(axis=0, ddof=1)
    var_pred = p.var(axis=0, ddof=1)
    v_pred = p - mean_pred
    v_gt = g - mean_gt
    cor = (v_pred * v_gt).sum() / (
        np.sqrt((v_pred ** 2).sum()) * np.sqrt((v_gt ** 2).sum())
    )
    sd_gt = g.std(ddof=1)
    sd_pred = p.std(ddof=1)
    numerator = 2 * cor * sd_gt * sd_pred
    denominator = var_gt + var_pred + (mean_gt - mean_pred) ** 2
    return 1 - numerator / denominator


if __name__ == "__main__":
    key = jax.random.PRNGKey(0)
    ks = jax.random.split(key, 8)

    # Case 1: small shape matching the module's typical use (batch=8, dim=4).
    # Aligned -> no mask code emitted, single tile, single chunk.
    N, D = 8, 4
    prediction = jax.random.normal(ks[0], (N, D), dtype=jnp.float32)
    ground_truth = jax.random.normal(ks[1], (N, D), dtype=jnp.float32)
    out = jax.block_until_ready(ccc_loss(prediction, ground_truth))
    ref = _ccc_loss_ref(np.array(prediction), np.array(ground_truth))
    np.testing.assert_allclose(np.array(out), ref, rtol=1e-5, atol=1e-5)

    # Case 2: lane densification (g=32, W=128) + row padding + ragged mask +
    # 2-way parallel split.
    N2, D2 = 300, 4
    p2 = jax.random.normal(ks[2], (N2, D2), dtype=jnp.float32)
    g2 = jax.random.normal(ks[3], (N2, D2), dtype=jnp.float32)
    out2 = jax.block_until_ready(ccc_loss(p2, g2, tn=8))
    ref2 = _ccc_loss_ref(np.array(p2), np.array(g2))
    np.testing.assert_allclose(np.array(out2), ref2, rtol=1e-4, atol=1e-5)

    # Case 3: odd tile count -> last parallel chunk has a clamped duplicate
    # tile that must be fully masked out.
    N3, D3 = 768, 4
    p3 = jax.random.normal(ks[4], (N3, D3), dtype=jnp.float32)
    g3 = jax.random.normal(ks[5], (N3, D3), dtype=jnp.float32)
    out3 = jax.block_until_ready(ccc_loss(p3, g3, tn=8))
    ref3 = _ccc_loss_ref(np.array(p3), np.array(g3))
    np.testing.assert_allclose(np.array(out3), ref3, rtol=1e-4, atol=1e-5)

    # Case 4: wide D (no densification, g=1) with a ragged edge tile.
    N4, D4 = 100, 256
    p4 = jax.random.normal(ks[6], (N4, D4), dtype=jnp.float32)
    g4 = jax.random.normal(ks[7], (N4, D4), dtype=jnp.float32)
    out4 = jax.block_until_ready(ccc_loss(p4, g4, tn=64))
    ref4 = _ccc_loss_ref(np.array(p4), np.array(g4))
    np.testing.assert_allclose(np.array(out4), ref4, rtol=1e-4, atol=1e-5)

    print("KERNEL_OK")
</pallas_src>

<mosaic_0001>
module attributes {stable_mosaic.version = 11 : i64} {
  func.func @kernel(%arg0: i32, %arg1: i32, %arg2: memref<8x4xf32, #tpu.memory_space<vmem>>, %arg3: memref<8x4xf32, #tpu.memory_space<vmem>>, %arg4: memref<1x5x8x4xf32, #tpu.memory_space<vmem>>, %arg5: memref<8x4xf32, #tpu.memory_space<vmem>>, %arg6: memref<8x4xf32, #tpu.memory_space<vmem>>, %arg7: memref<8x4xf32, #tpu.memory_space<vmem>>, %arg8: memref<8x4xf32, #tpu.memory_space<vmem>>, %arg9: memref<8x4xf32, #tpu.memory_space<vmem>>) attributes {dimension_semantics = [#tpu.dimension_semantics<parallel>, #tpu.dimension_semantics<arbitrary>], iteration_bounds = array<i64: 1, 1>, scalar_prefetch = 0 : i64, scratch_operands = 5 : i64, tpu.core_type = #tpu.core_type<tc>, window_params = [{transform_indices = @transform_0, window_bounds = array<i64: 8, 4>}, {transform_indices = @transform_1, window_bounds = array<i64: 8, 4>}, {transform_indices = @transform_2, window_bounds = array<i64: 1, 5, 8, 4>}]} {
    %c0_i32 = arith.constant 0 : i32
    %0 = arith.cmpi eq, %arg1, %c0_i32 : i32
    %1 = arith.extui %0 : i1 to i32
    %c0_i32_0 = arith.constant 0 : i32
    %2 = arith.cmpi ne, %1, %c0_i32_0 : i32
    scf.if %2 {
      %cst_30 = arith.constant 0.000000e+00 : f32
      %33 = vector.broadcast %cst_30 : f32 to vector<8x4xf32>
      %c0_31 = arith.constant 0 : index
      %c0_32 = arith.constant 0 : index
      %34 = vector.load %arg5[%c0_31, %c0_32] : memref<8x4xf32, #tpu.memory_space<vmem>>, vector<8x4xf32>
      tpu.vector_store %arg5[%c0_31, %c0_32], %33 {strides = array<i32>} : memref<8x4xf32, #tpu.memory_space<vmem>>, vector<8x4xf32>,
      %cst_33 = arith.constant 0.000000e+00 : f32
      %35 = vector.broadcast %cst_33 : f32 to vector<8x4xf32>
      %c0_34 = arith.constant 0 : index
      %c0_35 = arith.constant 0 : index
      %36 = vector.load %arg6[%c0_34, %c0_35] : memref<8x4xf32, #tpu.memory_space<vmem>>, vector<8x4xf32>
      tpu.vector_store %arg6[%c0_34, %c0_35], %35 {strides = array<i32>} : memref<8x4xf32, #tpu.memory_space<vmem>>, vector<8x4xf32>,
      %cst_36 = arith.constant 0.000000e+00 : f32
      %37 = vector.broadcast %cst_36 : f32 to vector<8x4xf32>
      %c0_37 = arith.constant 0 : index
      %c0_38 = arith.constant 0 : index
      %38 = vector.load %arg7[%c0_37, %c0_38] : memref<8x4xf32, #tpu.memory_space<vmem>>, vector<8x4xf32>
      tpu.vector_store %arg7[%c0_37, %c0_38], %37 {strides = array<i32>} : memref<8x4xf32, #tpu.memory_space<vmem>>, vector<8x4xf32>,
      %cst_39 = arith.constant 0.000000e+00 : f32
      %39 = vector.broadcast %cst_39 : f32 to vector<8x4xf32>
      %c0_40 = arith.constant 0 : index
      %c0_41 = arith.constant 0 : index
      %40 = vector.load %arg8[%c0_40, %c0_41] : memref<8x4xf32, #tpu.memory_space<vmem>>, vector<8x4xf32>
      tpu.vector_store %arg8[%c0_40, %c0_41], %39 {strides = array<i32>} : memref<8x4xf32, #tpu.memory_space<vmem>>, vector<8x4xf32>,
      %cst_42 = arith.constant 0.000000e+00 : f32
      %41 = vector.broadcast %cst_42 : f32 to vector<8x4xf32>
      %c0_43 = arith.constant 0 : index
      %c0_44 = arith.constant 0 : index
      %42 = vector.load %arg9[%c0_43, %c0_44] : memref<8x4xf32, #tpu.memory_space<vmem>>, vector<8x4xf32>
      tpu.vector_store %arg9[%c0_43, %c0_44], %41 {strides = array<i32>} : memref<8x4xf32, #tpu.memory_space<vmem>>, vector<8x4xf32>,
    } else {
    }
    %c0 = arith.constant 0 : index
    %c0_1 = arith.constant 0 : index
    %3 = vector.load %arg2[%c0, %c0_1] : memref<8x4xf32, #tpu.memory_space<vmem>>, vector<8x4xf32>
    %c0_2 = arith.constant 0 : index
    %c0_3 = arith.constant 0 : index
    %4 = vector.load %arg3[%c0_2, %c0_3] : memref<8x4xf32, #tpu.memory_space<vmem>>, vector<8x4xf32>
    %5 = vector.shape_cast %3 : vector<8x4xf32> to vector<1x8x4xf32>
    %6 = vector.shape_cast %4 : vector<8x4xf32> to vector<1x8x4xf32>
    %c0_4 = arith.constant 0 : index
    %c0_5 = arith.constant 0 : index
    %7 = vector.load %arg5[%c0_4, %c0_5] : memref<8x4xf32, #tpu.memory_space<vmem>>, vector<8x4xf32>
    %cst = arith.constant dense<0.000000e+00> : vector<8x4xf32>
    %8 = vector.multi_reduction <add>, %5, %cst [0] : vector<1x8x4xf32> to vector<8x4xf32>
    %9 = arith.addf %7, %8 : vector<8x4xf32>
    %c0_6 = arith.constant 0 : index
    %c0_7 = arith.constant 0 : index
    %10 = vector.load %arg5[%c0_6, %c0_7] : memref<8x4xf32, #tpu.memory_space<vmem>>, vector<8x4xf32>
    tpu.vector_store %arg5[%c0_6, %c0_7], %9 {strides = array<i32>} : memref<8x4xf32, #tpu.memory_space<vmem>>, vector<8x4xf32>,
    %c0_8 = arith.constant 0 : index
    %c0_9 = arith.constant 0 : index
    %11 = vector.load %arg6[%c0_8, %c0_9] : memref<8x4xf32, #tpu.memory_space<vmem>>, vector<8x4xf32>
    %cst_10 = arith.constant dense<0.000000e+00> : vector<8x4xf32>
    %12 = vector.multi_reduction <add>, %6, %cst_10 [0] : vector<1x8x4xf32> to vector<8x4xf32>
    %13 = arith.addf %11, %12 : vector<8x4xf32>
    %c0_11 = arith.constant 0 : index
    %c0_12 = arith.constant 0 : index
    %14 = vector.load %arg6[%c0_11, %c0_12] : memref<8x4xf32, #tpu.memory_space<vmem>>, vector<8x4xf32>
    tpu.vector_store %arg6[%c0_11, %c0_12], %13 {strides = array<i32>} : memref<8x4xf32, #tpu.memory_space<vmem>>, vector<8x4xf32>,
    %c0_13 = arith.constant 0 : index
    %c0_14 = arith.constant 0 : index
    %15 = vector.load %arg7[%c0_13, %c0_14] : memref<8x4xf32, #tpu.memory_space<vmem>>, vector<8x4xf32>
    %16 = arith.mulf %5, %5 : vector<1x8x4xf32>
    %cst_15 = arith.constant dense<0.000000e+00> : vector<8x4xf32>
    %17 = vector.multi_reduction <add>, %16, %cst_15 [0] : vector<1x8x4xf32> to vector<8x4xf32>
    %18 = arith.addf %15, %17 : vector<8x4xf32>
    %c0_16 = arith.constant 0 : index
    %c0_17 = arith.constant 0 : index
    %19 = vector.load %arg7[%c0_16, %c0_17] : memref<8x4xf32, #tpu.memory_space<vmem>>, vector<8x4xf32>
    tpu.vector_store %arg7[%c0_16, %c0_17], %18 {strides = array<i32>} : memref<8x4xf32, #tpu.memory_space<vmem>>, vector<8x4xf32>,
    %c0_18 = arith.constant 0 : index
    %c0_19 = arith.constant 0 : index
    %20 = vector.load %arg8[%c0_18, %c0_19] : memref<8x4xf32, #tpu.memory_space<vmem>>, vector<8x4xf32>
    %21 = arith.mulf %6, %6 : vector<1x8x4xf32>
    %cst_20 = arith.constant dense<0.000000e+00> : vector<8x4xf32>
    %22 = vector.multi_reduction <add>, %21, %cst_20 [0] : vector<1x8x4xf32> to vector<8x4xf32>
    %23 = arith.addf %20, %22 : vector<8x4xf32>
    %c0_21 = arith.constant 0 : index
    %c0_22 = arith.constant 0 : index
    %24 = vector.load %arg8[%c0_21, %c0_22] : memref<8x4xf32, #tpu.memory_space<vmem>>, vector<8x4xf32>
    tpu.vector_store %arg8[%c0_21, %c0_22], %23 {strides = array<i32>} : memref<8x4xf32, #tpu.memory_space<vmem>>, vector<8x4xf32>,
    %c0_23 = arith.constant 0 : index
    %c0_24 = arith.constant 0 : index
    %25 = vector.load %arg9[%c0_23, %c0_24] : memref<8x4xf32, #tpu.memory_space<vmem>>, vector<8x4xf32>
    %26 = arith.mulf %5, %6 : vector<1x8x4xf32>
    %cst_25 = arith.constant dense<0.000000e+00> : vector<8x4xf32>
    %27 = vector.multi_reduction <add>, %26, %cst_25 [0] : vector<1x8x4xf32> to vector<8x4xf32>
    %28 = arith.addf %25, %27 : vector<8x4xf32>
    %c0_26 = arith.constant 0 : index
    %c0_27 = arith.constant 0 : index
    %29 = vector.load %arg9[%c0_26, %c0_27] : memref<8x4xf32, #tpu.memory_space<vmem>>, vector<8x4xf32>
    tpu.vector_store %arg9[%c0_26, %c0_27], %28 {strides = array<i32>} : memref<8x4xf32, #tpu.memory_space<vmem>>, vector<8x4xf32>,
    %c0_i32_28 = arith.constant 0 : i32
    %30 = arith.cmpi eq, %arg1, %c0_i32_28 : i32
    %31 = arith.extui %30 : i1 to i32
    %c0_i32_29 = arith.constant 0 : i32
    %32 = arith.cmpi ne, %31, %c0_i32_29 : i32
    scf.if %32 {
      %c0_30 = arith.constant 0 : index
      %c0_31 = arith.constant 0 : index
      %33 = vector.load %arg5[%c0_30, %c0_31] : memref<8x4xf32, #tpu.memory_space<vmem>>, vector<8x4xf32>
      %c0_32 = arith.constant 0 : index
      %c0_33 = arith.constant 0 : index
      %c0_34 = arith.constant 0 : index
      %c0_35 = arith.constant 0 : index
      %34 = vector.load %arg4[%c0_32, %c0_33, %c0_34, %c0_35] : memref<1x5x8x4xf32, #tpu.memory_space<vmem>>, vector<1x1x8x4xf32>
      %35 = vector.shape_cast %34 : vector<1x1x8x4xf32> to vector<8x4xf32>
      %36 = vector.shape_cast %33 : vector<8x4xf32> to vector<1x1x8x4xf32>
      tpu.vector_store %arg4[%c0_32, %c0_33, %c0_34, %c0_35], %36 {strides = array<i32>} : memref<1x5x8x4xf32, #tpu.memory_space<vmem>>, vector<1x1x8x4xf32>,
      %c0_36 = arith.constant 0 : index
      %c0_37 = arith.constant 0 : index
      %37 = vector.load %arg6[%c0_36, %c0_37] : memref<8x4xf32, #tpu.memory_space<vmem>>, vector<8x4xf32>
      %c0_38 = arith.constant 0 : index
      %c1 = arith.constant 1 : index
      %c0_39 = arith.constant 0 : index
      %c0_40 = arith.constant 0 : index
      %38 = vector.load %arg4[%c0_38, %c1, %c0_39, %c0_40] : memref<1x5x8x4xf32, #tpu.memory_space<vmem>>, vector<1x1x8x4xf32>
      %39 = vector.shape_cast %38 : vector<1x1x8x4xf32> to vector<8x4xf32>
      %40 = vector.shape_cast %37 : vector<8x4xf32> to vector<1x1x8x4xf32>
      tpu.vector_store %arg4[%c0_38, %c1, %c0_39, %c0_40], %40 {strides = array<i32>} : memref<1x5x8x4xf32, #tpu.memory_space<vmem>>, vector<1x1x8x4xf32>,
      %c0_41 = arith.constant 0 : index
      %c0_42 = arith.constant 0 : index
      %41 = vector.load %arg7[%c0_41, %c0_42] : memref<8x4xf32, #tpu.memory_space<vmem>>, vector<8x4xf32>
      %c0_43 = arith.constant 0 : index
      %c2 = arith.constant 2 : index
      %c0_44 = arith.constant 0 : index
      %c0_45 = arith.constant 0 : index
      %42 = vector.load %arg4[%c0_43, %c2, %c0_44, %c0_45] : memref<1x5x8x4xf32, #tpu.memory_space<vmem>>, vector<1x1x8x4xf32>
      %43 = vector.shape_cast %42 : vector<1x1x8x4xf32> to vector<8x4xf32>
      %44 = vector.shape_cast %41 : vector<8x4xf32> to vector<1x1x8x4xf32>
      tpu.vector_store %arg4[%c0_43, %c2, %c0_44, %c0_45], %44 {strides = array<i32>} : memref<1x5x8x4xf32, #tpu.memory_space<vmem>>, vector<1x1x8x4xf32>,
      %c0_46 = arith.constant 0 : index
      %c0_47 = arith.constant 0 : index
      %45 = vector.load %arg8[%c0_46, %c0_47] : memref<8x4xf32, #tpu.memory_space<vmem>>, vector<8x4xf32>
      %c0_48 = arith.constant 0 : index
      %c3 = arith.constant 3 : index
      %c0_49 = arith.constant 0 : index
      %c0_50 = arith.constant 0 : index
      %46 = vector.load %arg4[%c0_48, %c3, %c0_49, %c0_50] : memref<1x5x8x4xf32, #tpu.memory_space<vmem>>, vector<1x1x8x4xf32>
      %47 = vector.shape_cast %46 : vector<1x1x8x4xf32> to vector<8x4xf32>
      %48 = vector.shape_cast %45 : vector<8x4xf32> to vector<1x1x8x4xf32>
      tpu.vector_store %arg4[%c0_48, %c3, %c0_49, %c0_50], %48 {strides = array<i32>} : memref<1x5x8x4xf32, #tpu.memory_space<vmem>>, vector<1x1x8x4xf32>,
      %c0_51 = arith.constant 0 : index
      %c0_52 = arith.constant 0 : index
      %49 = vector.load %arg9[%c0_51, %c0_52] : memref<8x4xf32, #tpu.memory_space<vmem>>, vector<8x4xf32>
      %c0_53 = arith.constant 0 : index
      %c4 = arith.constant 4 : index
      %c0_54 = arith.constant 0 : index
      %c0_55 = arith.constant 0 : index
      %50 = vector.load %arg4[%c0_53, %c4, %c0_54, %c0_55] : memref<1x5x8x4xf32, #tpu.memory_space<vmem>>, vector<1x1x8x4xf32>
      %51 = vector.shape_cast %50 : vector<1x1x8x4xf32> to vector<8x4xf32>
      %52 = vector.shape_cast %49 : vector<8x4xf32> to vector<1x1x8x4xf32>
      tpu.vector_store %arg4[%c0_53, %c4, %c0_54, %c0_55], %52 {strides = array<i32>} : memref<1x5x8x4xf32, #tpu.memory_space<vmem>>, vector<1x1x8x4xf32>,
    } else {
    }
    return
  }
  func.func @transform_0(%arg0: i32, %arg1: i32) -> (i32, i32) {
    %c1_i32 = arith.constant 1 : i32
    %0 = arith.muli %arg0, %c1_i32 : i32
    %1 = arith.addi %0, %arg1 : i32
    %c0_i32 = arith.constant 0 : i32
    %2 = arith.minsi %1, %c0_i32 : i32
    %c0_i32_0 = arith.constant 0 : i32
    %c0_i32_1 = arith.constant 0 : i32
    return %2, %c0_i32_0 : i32, i32
  }
  func.func @transform_1(%arg0: i32, %arg1: i32) -> (i32, i32) {
    %c1_i32 = arith.constant 1 : i32
    %0 = arith.muli %arg0, %c1_i32 : i32
    %1 = arith.addi %0, %arg1 : i32
    %c0_i32 = arith.constant 0 : i32
    %2 = arith.minsi %1, %c0_i32 : i32
    %c0_i32_0 = arith.constant 0 : i32
    %c0_i32_1 = arith.constant 0 : i32
    return %2, %c0_i32_0 : i32, i32
  }
  func.func @transform_2(%arg0: i32, %arg1: i32) -> (i32, i32, i32, i32) {
    %c0_i32 = arith.constant 0 : i32
    %c0_i32_0 = arith.constant 0 : i32
    %c0_i32_1 = arith.constant 0 : i32
    %c0_i32_2 = arith.constant 0 : i32
    return %arg0, %c0_i32, %c0_i32_0, %c0_i32_1 : i32, i32, i32, i32
  }
}

</mosaic_0001>

<llo_original>
// kernel: tpu_custom_call.1
$region0: #{tpu_custom_call.1}
  #allocation0 [shape = 'u32[]', space=smem, size = 0x4, offset = 0x4, fixed_abs, tag = 'smem constant byte address 0x4 - core index']
  #allocation1 [shape = 'u32[72,128]{1,0:T(1,128)}', space=vmem, size = 0x9000, scoped, tag = 'internal scratch']
  #allocation2 [shape = 'f32[8,4]{1,0:T(8,128)}', space=vmem, size = 0x1000, scoped, tag = 'scratch operand']
  #allocation3 [shape = 'f32[8,4]{1,0:T(8,128)}', space=vmem, size = 0x1000, scoped, tag = 'scratch operand']
  #allocation4 [shape = 'f32[8,4]{1,0:T(8,128)}', space=vmem, size = 0x1000, scoped, tag = 'scratch operand']
  #allocation5 [shape = 'f32[8,4]{1,0:T(8,128)}', space=vmem, size = 0x1000, scoped, tag = 'scratch operand']
  #allocation6 [shape = 'f32[8,4]{1,0:T(8,128)}', space=vmem, size = 0x1000, scoped, tag = 'scratch operand']
  %s0 = inlined_call_operand.vmem [shape: f32[8,4], index: 0, kind: input, shape index: {}]
  %s1 = inlined_call_operand.vmem [shape: f32[8,4], index: 1, kind: input, shape index: {}]
  %s2 = inlined_call_operand.vmem [shape: f32[1,5,8,4], index: 2, kind: output, shape index: {}]
  %s3 = sld [smem:[#allocation0]]
  $region26: #{tpu_custom_call.1} parent=0
    _
  %s5 = ssub.s32 1, %s3
  %s6 = scalar_select 0, %s5, %s3
  // Predicated region
  $region2: #{tpu_custom_call.1} parent=0 // pred_check
    _
  $region3: #{tpu_custom_call.1} parent=0 // pred_check_branch
    %8 = sbr.rel (0) target = $region5
  $region4: #{tpu_custom_call.1} parent=0 // pred_region
    %s9 = sadd.s32 0, 0
    %p10 = scmp.lt.s32.totalorder %s9, 0
    %s11 = scalar_select %p10, %s9, 0
    %p12 = scmp.lt.s32.totalorder %s11, 0
    %s13 = scalar_select %p12, %s11, 0
    %s14 = smul.addr %s13, 8
    %s15 = scalar_lea.vmem %s0, %s14
    %s16 = sadd.s32 0, 0
    %p17 = scmp.lt.s32.totalorder %s16, 0
    %s18 = scalar_select %p17, %s16, 0
  $region5: #{tpu_custom_call.1} parent=0 // pred_fallthru
    _
  // Predicated region
  $region6: #{tpu_custom_call.1} parent=0 // pred_check
    _
  $region7: #{tpu_custom_call.1} parent=0 // pred_check_branch
    %20 = sbr.rel (0) target = $region9
  $region8: #{tpu_custom_call.1} parent=0 // pred_region
    %s21 = sadd.s32 0, 0
    %p22 = scmp.lt.s32.totalorder %s21, 0
    %s23 = scalar_select %p22, %s21, 0
    %p24 = scmp.lt.s32.totalorder %s23, 0
    %s25 = scalar_select %p24, %s23, 0
    %s26 = smul.addr %s25, 8
    %s27 = scalar_lea.vmem %s1, %s26
    %s28 = sadd.s32 0, 0
    %p29 = scmp.lt.s32.totalorder %s28, 0
    %s30 = scalar_select %p29, %s28, 0
  $region9: #{tpu_custom_call.1} parent=0 // pred_fallthru
    _
  %s31 = sadd.s32 0, 0
  %p32 = scmp.lt.s32.totalorder %s31, 0
  %s33 = scalar_select %p32, %s31, 0
  %p34 = scmp.lt.s32.totalorder %s33, 0
  %s35 = scalar_select %p34, %s33, 0
  %s36 = smul.addr %s35, 8
  %s37 = scalar_lea.vmem %s0, %s36
  %s38 = sadd.s32 0, 0
  %p39 = scmp.lt.s32.totalorder %s38, 0
  %s40 = scalar_select %p39, %s38, 0
  %p41 = scmp.lt.s32.totalorder %s40, 0
  %s42 = scalar_select %p41, %s40, 0
  %s43 = smul.addr %s42, 8
  %s44 = scalar_lea.vmem %s1, %s43
  %s45 = sadd.s32 0, 0
  %p46 = scmp.lt.s32.totalorder %s45, 0
  %s47 = scalar_select %p46, %s45, 0
  %p48 = scmp.lt.s32.totalorder %s47, 0
  %s49 = scalar_select %p48, %s47, 0
  %s50 = smul.addr %s49, 8
  %s51 = scalar_lea.vmem %s0, %s50
  %s52 = sadd.s32 0, 0
  %p53 = scmp.lt.s32.totalorder %s52, 0
  %s54 = scalar_select %p53, %s52, 0
  %s55 = sadd.s32 0, 0
  %p56 = scmp.lt.s32.totalorder %s55, 0
  %s57 = scalar_select %p56, %s55, 0
  %p58 = scmp.lt.s32.totalorder %s57, 0
  %s59 = scalar_select %p58, %s57, 0
  %s60 = smul.addr %s59, 8
  %s61 = scalar_lea.vmem %s1, %s60
  %s62 = sadd.s32 0, 0
  %p63 = scmp.lt.s32.totalorder %s62, 0
  %s64 = scalar_select %p63, %s62, 0
  %p65 = scmp.eq.s32.totalorder 0, 0
  // Predicated region
  $region10: #{tpu_custom_call.1} parent=0 // pred_check
    %p66 = pneg %p65
  $region11: #{tpu_custom_call.1} parent=0 // pred_check_branch
    %68 = sbr.rel (%p66) target = $region13
  $region12: #{tpu_custom_call.1} parent=0 // pred_region
    %vm69 = vcmask 31744
    %70 = vst.msk [vmem:[#allocation2] sm:$0xff] %vm69, 0.0
    %71 = vst.msk [vmem:[#allocation3] sm:$0xff] %vm69, 0.0
    %72 = vst.msk [vmem:[#allocation4] sm:$0xff] %vm69, 0.0
    %73 = vst.msk [vmem:[#allocation5] sm:$0xff] %vm69, 0.0
    %74 = vst.msk [vmem:[#allocation6] sm:$0xff] %vm69, 0.0
  $region13: #{tpu_custom_call.1} parent=0 // pred_fallthru
    _
  %v75 = vld [vmem:[%s51] sm:$0xff]
  %v76 = vld [vmem:[%s61] sm:$0xff]
  %v77 = vld [vmem:[#allocation2] sm:$0xff]
  %v78 = vadd.f32 %v75, 0.0
  %v79 = vadd.f32 %v77, %v78
  %vm80 = vcmask 31744
  %81 = vst.msk [vmem:[#allocation2] sm:$0xff] %vm80, %v79
  %v82 = vld [vmem:[#allocation3] sm:$0xff]
  %v83 = vadd.f32 %v76, 0.0
  %v84 = vadd.f32 %v82, %v83
  %85 = vst.msk [vmem:[#allocation3] sm:$0xff] %vm80, %v84
  %v86 = vld [vmem:[#allocation4] sm:$0xff]
  %v87 = vmul.f32 %v75, %v75
  %v88 = vadd.f32 %v87, 0.0
  %v89 = vadd.f32 %v86, %v88
  %90 = vst.msk [vmem:[#allocation4] sm:$0xff] %vm80, %v89
  %v91 = vld [vmem:[#allocation5] sm:$0xff]
  %v92 = vmul.f32 %v76, %v76
  %v93 = vadd.f32 %v92, 0.0
  %v94 = vadd.f32 %v91, %v93
  %95 = vst.msk [vmem:[#allocation5] sm:$0xff] %vm80, %v94
  %v96 = vld [vmem:[#allocation6] sm:$0xff]
  %v97 = vmul.f32 %v75, %v76
  %v98 = vadd.f32 %v97, 0.0
  %v99 = vadd.f32 %v96, %v98
  %100 = vst.msk [vmem:[#allocation6] sm:$0xff] %vm80, %v99
  // Predicated region
  $region14: #{tpu_custom_call.1} parent=0 // pred_check
    %p101 = pneg %p65
  $region15: #{tpu_custom_call.1} parent=0 // pred_check_branch
    %103 = sbr.rel (%p101) target = $region17
  $region16: #{tpu_custom_call.1} parent=0 // pred_region
    %v104 = vld [vmem:[#allocation2] sm:$0xff]
    %105 = vst.msk [vmem:[%s2] sm:$0xff] %vm80, %v104
    %v106 = vld [vmem:[#allocation3] sm:$0xff]
    %s107 = scalar_lea.vmem %s2, 8
    %108 = vst.msk [vmem:[%s107] sm:$0xff] %vm80, %v106
    %v109 = vld [vmem:[#allocation4] sm:$0xff]
    %s110 = scalar_lea.vmem %s2, 16
    %111 = vst.msk [vmem:[%s110] sm:$0xff] %vm80, %v109
    %v112 = vld [vmem:[#allocation5] sm:$0xff]
    %s113 = scalar_lea.vmem %s2, 24
    %114 = vst.msk [vmem:[%s113] sm:$0xff] %vm80, %v112
    %v115 = vld [vmem:[#allocation6] sm:$0xff]
    %s116 = scalar_lea.vmem %s2, 32
    %117 = vst.msk [vmem:[%s116] sm:$0xff] %vm80, %v115
  $region17: #{tpu_custom_call.1} parent=0 // pred_fallthru
    _
  // Predicated region
  $region18: #{tpu_custom_call.1} parent=0 // pred_check
    _
  $region19: #{tpu_custom_call.1} parent=0 // pred_check_branch
    %119 = sbr.rel (0) target = $region21
  $region20: #{tpu_custom_call.1} parent=0 // pred_region
    _
  $region21: #{tpu_custom_call.1} parent=0 // pred_fallthru
    _
  // Predicated region
  $region22: #{tpu_custom_call.1} parent=0 // pred_check
    _
  $region23: #{tpu_custom_call.1} parent=0 // pred_check_branch
    %121 = sbr.rel (0) target = $region25
  $region24: #{tpu_custom_call.1} parent=0 // pred_region
    _
  $region25: #{tpu_custom_call.1} parent=0 // pred_fallthru
    _

</llo_original>
